<compile_context>
chip_gen: v6e
topology: v6e:2x2x1
jax: 0.10.0
libtpu: 0.0.40
codegen_flags: <defaults>
</compile_context>

<pallas_src>
import math
import jax
import jax.numpy as jnp
from jax.experimental import pallas as pl
from jax.experimental.pallas import tpu as pltpu


def _round_up(x, m):
    return ((x + m - 1) // m) * m


def qnetwork_kernel(x_ref, w1_ref, b1_ref, w2_ref, b2_ref, w3_ref, b3_ref, o_ref):
    # x: (TB, F) f32 ; w*: f32 (in, out) resident ; b*: f32 (1, out) ; o: (TB, A) f32
    x = x_ref[...].astype(jnp.bfloat16)            # VPU cast, hidden under the x DMA
    w1 = w1_ref[...].astype(jnp.bfloat16)          # resident weights, cheap per-step cast
    h1 = jnp.dot(x, w1, preferred_element_type=jnp.float32) + b1_ref[...]
    h1 = jnp.maximum(h1, 0.0).astype(jnp.bfloat16)  # ReLU, back to bf16 for the MXU

    w2 = w2_ref[...].astype(jnp.bfloat16)
    h2 = jnp.dot(h1, w2, preferred_element_type=jnp.float32) + b2_ref[...]
    h2 = jnp.maximum(h2, 0.0).astype(jnp.bfloat16)  # ReLU

    w3 = w3_ref[...].astype(jnp.bfloat16)
    q = jnp.dot(h2, w3, preferred_element_type=jnp.float32) + b3_ref[...]
    o_ref[...] = q.astype(o_ref.dtype)              # (TB, A) store; output DMA contiguous


def qnetwork_forward(x, params, *, block_batch=1024):
    """x: (B, *input_shape) float32. Returns Q-values (B, action_size) float32."""
    w1, b1, w2, b2, w3, b3 = params
    B = x.shape[0]
    F = w1.shape[0]
    H = w1.shape[1]
    A = w3.shape[1]

    # nn.Flatten equivalent: free (bitcast) reshape, NO dtype cast of the dominant stream.
    x_flat = x.reshape(B, F)

    # Batch tile:
    #  - at most block_batch rows (f32 x tile: 4 MiB at TB=1024, F=1024 -> fits
    #    double-buffered in default scoped VMEM on v5e/v6e/v7x)
    #  - at most ceil(B/2) (rounded to a multiple of 16) so the "parallel" batch axis
    #    has >=2 grid steps and both v7x TensorCores get work
    #  - if the whole batch fits in one tile, use exactly B rows (full-dim block) so
    #    tiny batches need no padding at all.
    TB = min(block_batch, _round_up(pl.cdiv(B, 2), 16))
    if TB >= B:
        TB = B
    grid = (pl.cdiv(B, TB),)   # ragged tail handled by Pallas partial-block masking

    def resident(arr):
        # constant index_map -> block DMA'd once, stays resident in VMEM across the grid
        nd = arr.ndim
        return pl.BlockSpec(arr.shape, lambda i: (0,) * nd)

    flops = 2 * B * (F * H + H * H + H * A)
    bytes_accessed = (
        x_flat.size * 4                              # x read: f32, the dominant stream
        + (w1.size + w2.size + w3.size) * 4          # resident f32 weights (fetched once)
        + (b1.size + b2.size + b3.size) * 4
        + B * A * 4                                  # Q-value writeback, unpadded
    )

    return pl.pallas_call(
        qnetwork_kernel,
        out_shape=jax.ShapeDtypeStruct((B, A), jnp.float32),
        grid=grid,
        in_specs=[
            pl.BlockSpec((TB, F), lambda i: (i, 0)),   # x: streamed per batch tile
            resident(w1), resident(b1),
            resident(w2), resident(b2),
            resident(w3), resident(b3),
        ],
        out_specs=pl.BlockSpec((TB, A), lambda i: (i, 0)),
        compiler_params=pltpu.CompilerParams(
            dimension_semantics=("parallel",),   # shard batch tiles across TCs on v7x
        ),
        cost_estimate=pl.CostEstimate(
            flops=flops, transcendentals=0, bytes_accessed=bytes_accessed
        ),
    )(x_flat, w1, b1, w2, b2, w3, b3)


def kaiming_uniform(key, fan_in, fan_out):
    # matches torch.nn.init.kaiming_uniform_(..., nonlinearity='relu'):
    # bound = sqrt(3) * (sqrt(2) / sqrt(fan_in)) = sqrt(6 / fan_in)
    bound = math.sqrt(6.0 / fan_in)
    # stored as (in, out) so the kernel computes x @ W
    return jax.random.uniform(key, (fan_in, fan_out), jnp.float32, -bound, bound)


def init_qnetwork_params(key, flattened_size, action_size, hidden=64):
    k1, k2, k3 = jax.random.split(key, 3)
    w1 = kaiming_uniform(k1, flattened_size, hidden)
    b1 = jnp.zeros((1, hidden), jnp.float32)   # nn.init.constant_(bias, 0)
    w2 = kaiming_uniform(k2, hidden, hidden)
    b2 = jnp.zeros((1, hidden), jnp.float32)
    w3 = kaiming_uniform(k3, hidden, action_size)
    b3 = jnp.zeros((1, action_size), jnp.float32)
    return (w1, b1, w2, b2, w3, b3)


if __name__ == "__main__":
    key = jax.random.PRNGKey(0)

    # Small shapes consistent with the module: input_shape=(4,16,16) -> flattened 1024
    input_shape = (4, 16, 16)
    batch = 2
    action_size = 8
    flattened_size = int(math.prod(input_shape))

    pkey, xkey = jax.random.split(key)
    params = init_qnetwork_params(pkey, flattened_size, action_size)

    x = jax.random.normal(xkey, (batch, *input_shape), jnp.float32)

    q = qnetwork_forward(x, params)
    jax.block_until_ready(q)
    assert q.shape == (batch, action_size)

    # Reference that mirrors the kernel's bf16-matmul / f32-accumulate numerics.
    w1, b1, w2, b2, w3, b3 = params
    xf = x.reshape(batch, -1).astype(jnp.bfloat16)
    h1 = jnp.maximum(
        jnp.dot(xf, w1.astype(jnp.bfloat16), preferred_element_type=jnp.float32) + b1, 0.0
    ).astype(jnp.bfloat16)
    h2 = jnp.maximum(
        jnp.dot(h1, w2.astype(jnp.bfloat16), preferred_element_type=jnp.float32) + b2, 0.0
    ).astype(jnp.bfloat16)
    ref_bf = jnp.dot(h2, w3.astype(jnp.bfloat16), preferred_element_type=jnp.float32) + b3
    assert jnp.allclose(q, ref_bf, atol=2e-3, rtol=2e-3)

    # Looser sanity check against the full-f32 forward (bf16 activation rounding).
    # TODO(synk): bf16 matmul inputs are fine for argmax action selection; revisit if
    # exact-f32 TD targets are required (switch the kernel to f32 matmuls — still mem-bound).
    ref_f32 = jnp.maximum(x.reshape(batch, -1) @ w1 + b1, 0.0)
    ref_f32 = jnp.maximum(ref_f32 @ w2 + b2, 0.0)
    ref_f32 = ref_f32 @ w3 + b3
    assert jnp.allclose(q, ref_f32, atol=5e-2, rtol=5e-2)

    print("KERNEL_OK")
</pallas_src>

<mosaic_0001>
module attributes {stable_mosaic.version = 11 : i64} {
  func.func @qnetwork_kernel(%arg0: i32, %arg1: memref<2x1024xf32, #tpu.memory_space<vmem>>, %arg2: memref<1024x64xf32, #tpu.memory_space<vmem>>, %arg3: memref<1x64xf32, #tpu.memory_space<vmem>>, %arg4: memref<64x64xf32, #tpu.memory_space<vmem>>, %arg5: memref<1x64xf32, #tpu.memory_space<vmem>>, %arg6: memref<64x8xf32, #tpu.memory_space<vmem>>, %arg7: memref<1x8xf32, #tpu.memory_space<vmem>>, %arg8: memref<2x8xf32, #tpu.memory_space<vmem>>) attributes {dimension_semantics = [#tpu.dimension_semantics<parallel>], iteration_bounds = array<i64: 1>, scalar_prefetch = 0 : i64, scratch_operands = 0 : i64, tpu.core_type = #tpu.core_type<tc>, window_params = [{transform_indices = @transform_0, window_bounds = array<i64: 2, 1024>}, {pipeline_mode = #tpu.pipeline_mode<synchronous>, transform_indices = @transform_1, window_bounds = array<i64: 1024, 64>}, {pipeline_mode = #tpu.pipeline_mode<synchronous>, transform_indices = @transform_2, window_bounds = array<i64: 1, 64>}, {pipeline_mode = #tpu.pipeline_mode<synchronous>, transform_indices = @transform_3, window_bounds = array<i64: 64, 64>}, {pipeline_mode = #tpu.pipeline_mode<synchronous>, transform_indices = @transform_4, window_bounds = array<i64: 1, 64>}, {pipeline_mode = #tpu.pipeline_mode<synchronous>, transform_indices = @transform_5, window_bounds = array<i64: 64, 8>}, {pipeline_mode = #tpu.pipeline_mode<synchronous>, transform_indices = @transform_6, window_bounds = array<i64: 1, 8>}, {transform_indices = @transform_7, window_bounds = array<i64: 2, 8>}]} {
    %c0 = arith.constant 0 : index
    %c0_0 = arith.constant 0 : index
    %0 = vector.load %arg1[%c0, %c0_0] : memref<2x1024xf32, #tpu.memory_space<vmem>>, vector<2x1024xf32>
    %1 = arith.truncf %0 : vector<2x1024xf32> to vector<2x1024xbf16>
    %c0_1 = arith.constant 0 : index
    %c0_2 = arith.constant 0 : index
    %2 = vector.load %arg2[%c0_1, %c0_2] : memref<1024x64xf32, #tpu.memory_space<vmem>>, vector<1024x64xf32>
    %3 = arith.truncf %2 : vector<1024x64xf32> to vector<1024x64xbf16>
    %cst = arith.constant dense<0.000000e+00> : vector<2x64xf32>
    %4 = tpu.matmul %1, %3, %cst {dimension_numbers = #tpu.dot_dimension_numbers<[1], [0], [0], [1], [0, 0, 1, 1], [], []>} : vector<2x1024xbf16>, vector<1024x64xbf16>, vector<2x64xf32> -> vector<2x64xf32>
    %c0_3 = arith.constant 0 : index
    %c0_4 = arith.constant 0 : index
    %5 = vector.load %arg3[%c0_3, %c0_4] : memref<1x64xf32, #tpu.memory_space<vmem>>, vector<1x64xf32>
    %6 = vector.broadcast %5 : vector<1x64xf32> to vector<2x64xf32>
    %7 = arith.addf %4, %6 : vector<2x64xf32>
    %cst_5 = arith.constant 0.000000e+00 : f32
    %8 = vector.broadcast %cst_5 : f32 to vector<2x64xf32>
    %9 = arith.maximumf %7, %8 : vector<2x64xf32>
    %10 = arith.truncf %9 : vector<2x64xf32> to vector<2x64xbf16>
    %c0_6 = arith.constant 0 : index
    %c0_7 = arith.constant 0 : index
    %11 = vector.load %arg4[%c0_6, %c0_7] : memref<64x64xf32, #tpu.memory_space<vmem>>, vector<64x64xf32>
    %12 = arith.truncf %11 : vector<64x64xf32> to vector<64x64xbf16>
    %cst_8 = arith.constant dense<0.000000e+00> : vector<2x64xf32>
    %13 = tpu.matmul %10, %12, %cst_8 {dimension_numbers = #tpu.dot_dimension_numbers<[1], [0], [0], [1], [0, 0, 1, 1], [], []>} : vector<2x64xbf16>, vector<64x64xbf16>, vector<2x64xf32> -> vector<2x64xf32>
    %c0_9 = arith.constant 0 : index
    %c0_10 = arith.constant 0 : index
    %14 = vector.load %arg5[%c0_9, %c0_10] : memref<1x64xf32, #tpu.memory_space<vmem>>, vector<1x64xf32>
    %15 = vector.broadcast %14 : vector<1x64xf32> to vector<2x64xf32>
    %16 = arith.addf %13, %15 : vector<2x64xf32>
    %cst_11 = arith.constant 0.000000e+00 : f32
    %17 = vector.broadcast %cst_11 : f32 to vector<2x64xf32>
    %18 = arith.maximumf %16, %17 : vector<2x64xf32>
    %19 = arith.truncf %18 : vector<2x64xf32> to vector<2x64xbf16>
    %c0_12 = arith.constant 0 : index
    %c0_13 = arith.constant 0 : index
    %20 = vector.load %arg6[%c0_12, %c0_13] : memref<64x8xf32, #tpu.memory_space<vmem>>, vector<64x8xf32>
    %21 = arith.truncf %20 : vector<64x8xf32> to vector<64x8xbf16>
    %cst_14 = arith.constant dense<0.000000e+00> : vector<2x8xf32>
    %22 = tpu.matmul %19, %21, %cst_14 {dimension_numbers = #tpu.dot_dimension_numbers<[1], [0], [0], [1], [0, 0, 1, 1], [], []>} : vector<2x64xbf16>, vector<64x8xbf16>, vector<2x8xf32> -> vector<2x8xf32>
    %c0_15 = arith.constant 0 : index
    %c0_16 = arith.constant 0 : index
    %23 = vector.load %arg7[%c0_15, %c0_16] : memref<1x8xf32, #tpu.memory_space<vmem>>, vector<1x8xf32>
    %24 = vector.broadcast %23 : vector<1x8xf32> to vector<2x8xf32>
    %25 = arith.addf %22, %24 : vector<2x8xf32>
    %c0_17 = arith.constant 0 : index
    %c0_18 = arith.constant 0 : index
    %26 = vector.load %arg8[%c0_17, %c0_18] : memref<2x8xf32, #tpu.memory_space<vmem>>, vector<2x8xf32>
    tpu.vector_store %arg8[%c0_17, %c0_18], %25 {strides = array<i32>} : memref<2x8xf32, #tpu.memory_space<vmem>>, vector<2x8xf32>,
    return
  }
  func.func @transform_0(%arg0: i32) -> (i32, i32) {
    %c0_i32 = arith.constant 0 : i32
    %c0_i32_0 = arith.constant 0 : i32
    return %arg0, %c0_i32 : i32, i32
  }
  func.func @transform_1(%arg0: i32) -> (i32, i32) {
    %c0_i32 = arith.constant 0 : i32
    %c0_i32_0 = arith.constant 0 : i32
    %c0_i32_1 = arith.constant 0 : i32
    return %c0_i32, %c0_i32_0 : i32, i32
  }
  func.func @transform_2(%arg0: i32) -> (i32, i32) {
    %c0_i32 = arith.constant 0 : i32
    %c0_i32_0 = arith.constant 0 : i32
    %c0_i32_1 = arith.constant 0 : i32
    return %c0_i32, %c0_i32_0 : i32, i32
  }
  func.func @transform_3(%arg0: i32) -> (i32, i32) {
    %c0_i32 = arith.constant 0 : i32
    %c0_i32_0 = arith.constant 0 : i32
    %c0_i32_1 = arith.constant 0 : i32
    return %c0_i32, %c0_i32_0 : i32, i32
  }
  func.func @transform_4(%arg0: i32) -> (i32, i32) {
    %c0_i32 = arith.constant 0 : i32
    %c0_i32_0 = arith.constant 0 : i32
    %c0_i32_1 = arith.constant 0 : i32
    return %c0_i32, %c0_i32_0 : i32, i32
  }
  func.func @transform_5(%arg0: i32) -> (i32, i32) {
    %c0_i32 = arith.constant 0 : i32
    %c0_i32_0 = arith.constant 0 : i32
    %c0_i32_1 = arith.constant 0 : i32
    return %c0_i32, %c0_i32_0 : i32, i32
  }
  func.func @transform_6(%arg0: i32) -> (i32, i32) {
    %c0_i32 = arith.constant 0 : i32
    %c0_i32_0 = arith.constant 0 : i32
    %c0_i32_1 = arith.constant 0 : i32
    return %c0_i32, %c0_i32_0 : i32, i32
  }
  func.func @transform_7(%arg0: i32) -> (i32, i32) {
    %c0_i32 = arith.constant 0 : i32
    %c0_i32_0 = arith.constant 0 : i32
    return %arg0, %c0_i32 : i32, i32
  }
}

</mosaic_0001>

<llo_original>
// kernel: tpu_custom_call.1
$region0: #{tpu_custom_call.1}
  #allocation0 [shape = 'u32[]', space=smem, size = 0x4, offset = 0x4, fixed_abs, tag = 'smem constant byte address 0x4 - core index']
  #allocation1 [shape = 'u32[144,128]{1,0:T(1,128)}', space=vmem, size = 0x12000, scoped, tag = 'internal scratch']
  %s0 = inlined_call_operand.vmem [shape: f32[2,1024], index: 0, kind: input, shape index: {}]
  %s1 = inlined_call_operand.vmem [shape: f32[1024,64], index: 1, kind: input, shape index: {}]
  %s2 = inlined_call_operand.vmem [shape: f32[1,64], index: 2, kind: input, shape index: {}]
  %s3 = inlined_call_operand.vmem [shape: f32[64,64], index: 3, kind: input, shape index: {}]
  %s4 = inlined_call_operand.vmem [shape: f32[1,64], index: 4, kind: input, shape index: {}]
  %s5 = inlined_call_operand.vmem [shape: f32[64,8], index: 5, kind: input, shape index: {}]
  %s6 = inlined_call_operand.vmem [shape: f32[1,8], index: 6, kind: input, shape index: {}]
  %s7 = inlined_call_operand.hbm [shape: f32[2,8], index: 7, kind: output, shape index: {}]
  %s8 = sld [smem:[#allocation0]]
  $region38: #{tpu_custom_call.1} parent=0
    _
  %s10 = ssub.s32 1, %s8
  %s11 = scalar_select 0, %s10, %s8
  $region1: #{tpu_custom_call.1} parent=0
    #allocation2 [shape = 'u8[1024]{0}', space=vmem, size = 0x400, scoped, tag = 'output window, operand 0, single buffered']
    #allocation3 [shape = 's32[1]{0}', space=sflag, size = 0x4, scoped, tag = 'scoped memory for tpu_custom_call.1']
    %12 = vsyncpa [#allocation3], 0
    // Predicated region
    $region2: #{tpu_custom_call.1} parent=1 // pred_check
      _
    $region3: #{tpu_custom_call.1} parent=1 // pred_check_branch
      %14 = sbr.rel (0) target = $region5
    $region4: #{tpu_custom_call.1} parent=1 // pred_region
      _
    $region5: #{tpu_custom_call.1} parent=1 // pred_fallthru
      _
    // Predicated region
    $region6: #{tpu_custom_call.1} parent=1 // pred_check
      _
    $region7: #{tpu_custom_call.1} parent=1 // pred_check_branch
      %16 = sbr.rel (0) target = $region9
    $region8: #{tpu_custom_call.1} parent=1 // pred_region
      _
    $region9: #{tpu_custom_call.1} parent=1 // pred_fallthru
      _
    // Predicated region
    $region10: #{tpu_custom_call.1} parent=1 // pred_check
      _
    $region11: #{tpu_custom_call.1} parent=1 // pred_check_branch
      %18 = sbr.rel (0) target = $region13
    $region12: #{tpu_custom_call.1} parent=1 // pred_region
      _
    $region13: #{tpu_custom_call.1} parent=1 // pred_fallthru
      _
    // Predicated region
    $region14: #{tpu_custom_call.1} parent=1 // pred_check
      _
    $region15: #{tpu_custom_call.1} parent=1 // pred_check_branch
      %20 = sbr.rel (0) target = $region17
    $region16: #{tpu_custom_call.1} parent=1 // pred_region
      _
    $region17: #{tpu_custom_call.1} parent=1 // pred_fallthru
      _
    // Predicated region
    $region18: #{tpu_custom_call.1} parent=1 // pred_check
      _
    $region19: #{tpu_custom_call.1} parent=1 // pred_check_branch
      %22 = sbr.rel (0) target = $region21
    $region20: #{tpu_custom_call.1} parent=1 // pred_region
      _
    $region21: #{tpu_custom_call.1} parent=1 // pred_fallthru
      _
    // Predicated region
    $region22: #{tpu_custom_call.1} parent=1 // pred_check
      _
    $region23: #{tpu_custom_call.1} parent=1 // pred_check_branch
      %24 = sbr.rel (0) target = $region25
    $region24: #{tpu_custom_call.1} parent=1 // pred_region
      _
    $region25: #{tpu_custom_call.1} parent=1 // pred_fallthru
      _
    // Predicated region
    $region26: #{tpu_custom_call.1} parent=1 // pred_check
      _
    $region27: #{tpu_custom_call.1} parent=1 // pred_check_branch
      %26 = sbr.rel (0) target = $region29
    $region28: #{tpu_custom_call.1} parent=1 // pred_region
      _
    $region29: #{tpu_custom_call.1} parent=1 // pred_fallthru
      _
    %v28 = vld [vmem:[%s0] sm:$0xff]
    %v29 = vld [vmem:[%s0 + $0x8] sm:$0xff]
    %v32 = vcombine.high %v28, %v28
    %v34 = vunpack.c.l.s4 1983009808
    %v35 = vunpack.c.0.s8 %v34
    %v36 = vlaneseq
    %v37 = vshrl.u32 %v36, 7
    %v38 = vsub.s32 %v35, %v37
    %v39 = vrot.slane %v28, %v38
    %v41 = vunpack.c.l.s4 1983009808
    %v42 = vunpack.c.0.s8 %v41
    %v43 = vlaneseq
    %v44 = vshrl.u32 %v43, 7
    %v45 = vsub.s32 %v42, %v44
    %v46 = vrot.slane %v32, %v45
    %v47 = vcombine.high %v39, %v39
    %v48 = vcombine.high %v46, %v46
    %v49 = vcombine.high %v29, %v29
    %v51 = vunpack.c.l.s4 1983009808
    %v52 = vunpack.c.0.s8 %v51
    %v53 = vlaneseq
    %v54 = vshrl.u32 %v53, 7
    %v55 = vsub.s32 %v52, %v54
    %v56 = vrot.slane %v29, %v55
    %v58 = vunpack.c.l.s4 1983009808
    %v59 = vunpack.c.0.s8 %v58
    %v60 = vlaneseq
    %v61 = vshrl.u32 %v60, 7
    %v62 = vsub.s32 %v59, %v61
    %v63 = vrot.slane %v49, %v62
    %v64 = vcombine.high %v56, %v56
    %v65 = vcombine.high %v63, %v63
    %v74 = vpack.c.bf16 %v39, %v39
    %v75 = vpack.c.bf16 %v47, %v47
    %v76 = vpack.c.bf16 %v46, %v46
    %v77 = vpack.c.bf16 %v48, %v48
    %v78 = vpack.c.bf16 %v56, %v56
    %v79 = vpack.c.bf16 %v64, %v64
    %v80 = vpack.c.bf16 %v63, %v63
    %v81 = vpack.c.bf16 %v65, %v65
    %v82 = vld [vmem:[%s1] sm:$0xff]
    %v83 = vld [vmem:[%s1 + $0x8] sm:$0xff]
    %v84 = vld [vmem:[%s1 + $0x10] sm:$0xff]
    %v85 = vld [vmem:[%s1 + $0x18] sm:$0xff]
    %v86 = vld [vmem:[%s1 + $0x20] sm:$0xff]
    %v87 = vld [vmem:[%s1 + $0x28] sm:$0xff]
    %v88 = vld [vmem:[%s1 + $0x30] sm:$0xff]
    %v89 = vld [vmem:[%s1 + $0x38] sm:$0xff]
    %v90 = vld [vmem:[%s1 + $0x40] sm:$0xff]
    %v91 = vld [vmem:[%s1 + $0x48] sm:$0xff]
    %v92 = vld [vmem:[%s1 + $0x50] sm:$0xff]
    %v93 = vld [vmem:[%s1 + $0x58] sm:$0xff]
    %v94 = vld [vmem:[%s1 + $0x60] sm:$0xff]
    %v95 = vld [vmem:[%s1 + $0x68] sm:$0xff]
    %v96 = vld [vmem:[%s1 + $0x70] sm:$0xff]
    %v97 = vld [vmem:[%s1 + $0x78] sm:$0xff]
    %v98 = vld [vmem:[%s1 + $0x80] sm:$0xff]
    %v99 = vld [vmem:[%s1 + $0x88] sm:$0xff]
    %v100 = vld [vmem:[%s1 + $0x90] sm:$0xff]
    %v101 = vld [vmem:[%s1 + $0x98] sm:$0xff]
    %v102 = vld [vmem:[%s1 + $0xa0] sm:$0xff]
    %v103 = vld [vmem:[%s1 + $0xa8] sm:$0xff]
    %v104 = vld [vmem:[%s1 + $0xb0] sm:$0xff]
    %v105 = vld [vmem:[%s1 + $0xb8] sm:$0xff]
    %v106 = vld [vmem:[%s1 + $0xc0] sm:$0xff]
    %v107 = vld [vmem:[%s1 + $0xc8] sm:$0xff]
    %v108 = vld [vmem:[%s1 + $0xd0] sm:$0xff]
    %v109 = vld [vmem:[%s1 + $0xd8] sm:$0xff]
    %v110 = vld [vmem:[%s1 + $0xe0] sm:$0xff]
    %v111 = vld [vmem:[%s1 + $0xe8] sm:$0xff]
    %v112 = vld [vmem:[%s1 + $0xf0] sm:$0xff]
    %v113 = vld [vmem:[%s1 + $0xf8] sm:$0xff]
    %v114 = vld [vmem:[%s1 + $0x100] sm:$0xff]
    %v115 = vld [vmem:[%s1 + $0x108] sm:$0xff]
    %v116 = vld [vmem:[%s1 + $0x110] sm:$0xff]
    %v117 = vld [vmem:[%s1 + $0x118] sm:$0xff]
    %v118 = vld [vmem:[%s1 + $0x120] sm:$0xff]
    %v119 = vld [vmem:[%s1 + $0x128] sm:$0xff]
    %v120 = vld [vmem:[%s1 + $0x130] sm:$0xff]
    %v121 = vld [vmem:[%s1 + $0x138] sm:$0xff]
    %v122 = vld [vmem:[%s1 + $0x140] sm:$0xff]
    %v123 = vld [vmem:[%s1 + $0x148] sm:$0xff]
    %v124 = vld [vmem:[%s1 + $0x150] sm:$0xff]
    %v125 = vld [vmem:[%s1 + $0x158] sm:$0xff]
    %v126 = vld [vmem:[%s1 + $0x160] sm:$0xff]
    %v127 = vld [vmem:[%s1 + $0x168] sm:$0xff]
    %v128 = vld [vmem:[%s1 + $0x170] sm:$0xff]
    %v129 = vld [vmem:[%s1 + $0x178] sm:$0xff]
    %v130 = vld [vmem:[%s1 + $0x180] sm:$0xff]
    %v131 = vld [vmem:[%s1 + $0x188] sm:$0xff]
    %v132 = vld [vmem:[%s1 + $0x190] sm:$0xff]
    %v133 = vld [vmem:[%s1 + $0x198] sm:$0xff]
    %v134 = vld [vmem:[%s1 + $0x1a0] sm:$0xff]
    %v135 = vld [vmem:[%s1 + $0x1a8] sm:$0xff]
    %v136 = vld [vmem:[%s1 + $0x1b0] sm:$0xff]
    %v137 = vld [vmem:[%s1 + $0x1b8] sm:$0xff]
    %v138 = vld [vmem:[%s1 + $0x1c0] sm:$0xff]
    %v139 = vld [vmem:[%s1 + $0x1c8] sm:$0xff]
    %v140 = vld [vmem:[%s1 + $0x1d0] sm:$0xff]
    %v141 = vld [vmem:[%s1 + $0x1d8] sm:$0xff]
    %v142 = vld [vmem:[%s1 + $0x1e0] sm:$0xff]
    %v143 = vld [vmem:[%s1 + $0x1e8] sm:$0xff]
    %v144 = vld [vmem:[%s1 + $0x1f0] sm:$0xff]
    %v145 = vld [vmem:[%s1 + $0x1f8] sm:$0xff]
    %v146 = vld [vmem:[%s1 + $0x200] sm:$0xff]
    %v147 = vld [vmem:[%s1 + $0x208] sm:$0xff]
    %v148 = vld [vmem:[%s1 + $0x210] sm:$0xff]
    %v149 = vld [vmem:[%s1 + $0x218] sm:$0xff]
    %v150 = vld [vmem:[%s1 + $0x220] sm:$0xff]
    %v151 = vld [vmem:[%s1 + $0x228] sm:$0xff]
    %v152 = vld [vmem:[%s1 + $0x230] sm:$0xff]
    %v153 = vld [vmem:[%s1 + $0x238] sm:$0xff]
    %v154 = vld [vmem:[%s1 + $0x240] sm:$0xff]
    %v155 = vld [vmem:[%s1 + $0x248] sm:$0xff]
    %v156 = vld [vmem:[%s1 + $0x250] sm:$0xff]
    %v157 = vld [vmem:[%s1 + $0x258] sm:$0xff]
    %v158 = vld [vmem:[%s1 + $0x260] sm:$0xff]
    %v159 = vld [vmem:[%s1 + $0x268] sm:$0xff]
    %v160 = vld [vmem:[%s1 + $0x270] sm:$0xff]
    %v161 = vld [vmem:[%s1 + $0x278] sm:$0xff]
    %v162 = vld [vmem:[%s1 + $0x280] sm:$0xff]
    %v163 = vld [vmem:[%s1 + $0x288] sm:$0xff]
    %v164 = vld [vmem:[%s1 + $0x290] sm:$0xff]
    %v165 = vld [vmem:[%s1 + $0x298] sm:$0xff]
    %v166 = vld [vmem:[%s1 + $0x2a0] sm:$0xff]
    %v167 = vld [vmem:[%s1 + $0x2a8] sm:$0xff]
    %v168 = vld [vmem:[%s1 + $0x2b0] sm:$0xff]
    %v169 = vld [vmem:[%s1 + $0x2b8] sm:$0xff]
    %v170 = vld [vmem:[%s1 + $0x2c0] sm:$0xff]
    %v171 = vld [vmem:[%s1 + $0x2c8] sm:$0xff]
    %v172 = vld [vmem:[%s1 + $0x2d0] sm:$0xff]
    %v173 = vld [vmem:[%s1 + $0x2d8] sm:$0xff]
    %v174 = vld [vmem:[%s1 + $0x2e0] sm:$0xff]
    %v175 = vld [vmem:[%s1 + $0x2e8] sm:$0xff]
    %v176 = vld [vmem:[%s1 + $0x2f0] sm:$0xff]
    %v177 = vld [vmem:[%s1 + $0x2f8] sm:$0xff]
    %v178 = vld [vmem:[%s1 + $0x300] sm:$0xff]
    %v179 = vld [vmem:[%s1 + $0x308] sm:$0xff]
    %v180 = vld [vmem:[%s1 + $0x310] sm:$0xff]
    %v181 = vld [vmem:[%s1 + $0x318] sm:$0xff]
    %v182 = vld [vmem:[%s1 + $0x320] sm:$0xff]
    %v183 = vld [vmem:[%s1 + $0x328] sm:$0xff]
    %v184 = vld [vmem:[%s1 + $0x330] sm:$0xff]
    %v185 = vld [vmem:[%s1 + $0x338] sm:$0xff]
    %v186 = vld [vmem:[%s1 + $0x340] sm:$0xff]
    %v187 = vld [vmem:[%s1 + $0x348] sm:$0xff]
    %v188 = vld [vmem:[%s1 + $0x350] sm:$0xff]
    %v189 = vld [vmem:[%s1 + $0x358] sm:$0xff]
    %v190 = vld [vmem:[%s1 + $0x360] sm:$0xff]
    %v191 = vld [vmem:[%s1 + $0x368] sm:$0xff]
    %v192 = vld [vmem:[%s1 + $0x370] sm:$0xff]
    %v193 = vld [vmem:[%s1 + $0x378] sm:$0xff]
    %v194 = vld [vmem:[%s1 + $0x380] sm:$0xff]
    %v195 = vld [vmem:[%s1 + $0x388] sm:$0xff]
    %v196 = vld [vmem:[%s1 + $0x390] sm:$0xff]
    %v197 = vld [vmem:[%s1 + $0x398] sm:$0xff]
    %v198 = vld [vmem:[%s1 + $0x3a0] sm:$0xff]
    %v199 = vld [vmem:[%s1 + $0x3a8] sm:$0xff]
    %v200 = vld [vmem:[%s1 + $0x3b0] sm:$0xff]
    %v201 = vld [vmem:[%s1 + $0x3b8] sm:$0xff]
    %v202 = vld [vmem:[%s1 + $0x3c0] sm:$0xff]
    %v203 = vld [vmem:[%s1 + $0x3c8] sm:$0xff]
    %v204 = vld [vmem:[%s1 + $0x3d0] sm:$0xff]
    %v205 = vld [vmem:[%s1 + $0x3d8] sm:$0xff]
    %v206 = vld [vmem:[%s1 + $0x3e0] sm:$0xff]
    %v207 = vld [vmem:[%s1 + $0x3e8] sm:$0xff]
    %v208 = vld [vmem:[%s1 + $0x3f0] sm:$0xff]
    %v209 = vld [vmem:[%s1 + $0x3f8] sm:$0xff]
    %v210 = vpack.c.bf16 %v83, %v82
    %v211 = vpack.c.bf16 %v85, %v84
    %v212 = vpack.c.bf16 %v87, %v86
    %v213 = vpack.c.bf16 %v89, %v88
    %v214 = vpack.c.bf16 %v91, %v90
    %v215 = vpack.c.bf16 %v93, %v92
    %v216 = vpack.c.bf16 %v95, %v94
    %v217 = vpack.c.bf16 %v97, %v96
    %v218 = vpack.c.bf16 %v99, %v98
    %v219 = vpack.c.bf16 %v101, %v100
    %v220 = vpack.c.bf16 %v103, %v102
    %v221 = vpack.c.bf16 %v105, %v104
    %v222 = vpack.c.bf16 %v107, %v106
    %v223 = vpack.c.bf16 %v109, %v108
    %v224 = vpack.c.bf16 %v111, %v110
    %v225 = vpack.c.bf16 %v113, %v112
    %v226 = vpack.c.bf16 %v115, %v114
    %v227 = vpack.c.bf16 %v117, %v116
    %v228 = vpack.c.bf16 %v119, %v118
    %v229 = vpack.c.bf16 %v121, %v120
    %v230 = vpack.c.bf16 %v123, %v122
    %v231 = vpack.c.bf16 %v125, %v124
    %v232 = vpack.c.bf16 %v127, %v126
    %v233 = vpack.c.bf16 %v129, %v128
    %v234 = vpack.c.bf16 %v131, %v130
    %v235 = vpack.c.bf16 %v133, %v132
    %v236 = vpack.c.bf16 %v135, %v134
    %v237 = vpack.c.bf16 %v137, %v136
    %v238 = vpack.c.bf16 %v139, %v138
    %v239 = vpack.c.bf16 %v141, %v140
    %v240 = vpack.c.bf16 %v143, %v142
    %v241 = vpack.c.bf16 %v145, %v144
    %v242 = vpack.c.bf16 %v147, %v146
    %v243 = vpack.c.bf16 %v149, %v148
    %v244 = vpack.c.bf16 %v151, %v150
    %v245 = vpack.c.bf16 %v153, %v152
    %v246 = vpack.c.bf16 %v155, %v154
    %v247 = vpack.c.bf16 %v157, %v156
    %v248 = vpack.c.bf16 %v159, %v158
    %v249 = vpack.c.bf16 %v161, %v160
    %v250 = vpack.c.bf16 %v163, %v162
    %v251 = vpack.c.bf16 %v165, %v164
    %v252 = vpack.c.bf16 %v167, %v166
    %v253 = vpack.c.bf16 %v169, %v168
    %v254 = vpack.c.bf16 %v171, %v170
    %v255 = vpack.c.bf16 %v173, %v172
    %v256 = vpack.c.bf16 %v175, %v174
    %v257 = vpack.c.bf16 %v177, %v176
    %v258 = vpack.c.bf16 %v179, %v178
    %v259 = vpack.c.bf16 %v181, %v180
    %v260 = vpack.c.bf16 %v183, %v182
    %v261 = vpack.c.bf16 %v185, %v184
    %v262 = vpack.c.bf16 %v187, %v186
    %v263 = vpack.c.bf16 %v189, %v188
    %v264 = vpack.c.bf16 %v191, %v190
    %v265 = vpack.c.bf16 %v193, %v192
    %v266 = vpack.c.bf16 %v195, %v194
    %v267 = vpack.c.bf16 %v197, %v196
    %v268 = vpack.c.bf16 %v199, %v198
    %v269 = vpack.c.bf16 %v201, %v200
    %v270 = vpack.c.bf16 %v203, %v202
    %v271 = vpack.c.bf16 %v205, %v204
    %v272 = vpack.c.bf16 %v207, %v206
    %v273 = vpack.c.bf16 %v209, %v208
    %v274 = vld [vmem:[%s2] sm:$0x1]
    %v276 = vlaneseq
    %v277 = vshrl.u32 %v276, 7
    %v278 = vsub.s32 0, %v277
    %v279 = vrot.slane %v274, %v278
    %281 = vmatprep.subr.bf16.mxu0 0
    %282 = vmatpush1.bf16.msra.mxu0 %v217
    %283 = vmatprep.subr.bf16.mxu0 0
    %284 = vmatpush1.bf16.msra.mxu0 %v216
    %285 = vmatprep.subr.bf16.mxu0 0
    %286 = vmatpush1.bf16.msra.mxu0 %v215
    %287 = vmatprep.subr.bf16.mxu0 0
    %288 = vmatpush1.bf16.msra.mxu0 %v214
    %289 = vmatprep.subr.bf16.mxu0 0
    %290 = vmatpush1.bf16.msra.mxu0 %v213
    %291 = vmatprep.subr.bf16.mxu0 0
    %292 = vmatpush1.bf16.msra.mxu0 %v212
    %293 = vmatprep.subr.bf16.mxu0 0
    %294 = vmatpush1.bf16.msra.mxu0 %v211
    %295 = vmatprep.subr.bf16.mxu0 0
    %296 = vmatpush1.bf16.msra.mxu0 %v210
    %297 = vmatprep.subr.bf16.mxu0 0
    %298 = vmatpush2.bf16.msra.mxu0 %v225
    %299 = vmatprep.subr.bf16.mxu0 0
    %300 = vmatpush2.bf16.msra.mxu0 %v224
    %301 = vmatprep.subr.bf16.mxu0 0
    %302 = vmatpush2.bf16.msra.mxu0 %v223
    %303 = vmatprep.subr.bf16.mxu0 0
    %304 = vmatpush2.bf16.msra.mxu0 %v222
    %305 = vmatprep.subr.bf16.mxu0 0
    %306 = vmatpush2.bf16.msra.mxu0 %v221
    %307 = vmatprep.subr.bf16.mxu0 0
    %308 = vmatpush2.bf16.msra.mxu0 %v220
    %309 = vmatprep.subr.bf16.mxu0 0
    %310 = vmatpush2.bf16.msra.mxu0 %v219
    %311 = vmatprep.subr.bf16.mxu0 0
    %312 = vmatpush2.bf16.msra.mxu0 %v218
    %313 = vmatprep.mubr.bf16.mxu0 %v75
    %314 = vmatmul.mubr.bf16.gmra.mxu0 %v74
    %v315 = vpop.f32.mrf.mxu0
    %v316 = vadd.f32 %v279, %v315
    %v317 = vpop.f32.mrf.mxu0
    %v318 = vpop.f32.mrf.mxu0
    %v319 = vpop.f32.mrf.mxu0
    %320 = vdwg.mxu0
    %321 = vmatprep.subr.bf16.mxu0 0
    %322 = vmatpush1.bf16.msra.mxu0 %v233
    %323 = vmatprep.subr.bf16.mxu0 0
    %324 = vmatpush1.bf16.msra.mxu0 %v232
    %325 = vmatprep.subr.bf16.mxu0 0
    %326 = vmatpush1.bf16.msra.mxu0 %v231
    %327 = vmatprep.subr.bf16.mxu0 0
    %328 = vmatpush1.bf16.msra.mxu0 %v230
    %329 = vmatprep.subr.bf16.mxu0 0
    %330 = vmatpush1.bf16.msra.mxu0 %v229
    %331 = vmatprep.subr.bf16.mxu0 0
    %332 = vmatpush1.bf16.msra.mxu0 %v228
    %333 = vmatprep.subr.bf16.mxu0 0
    %334 = vmatpush1.bf16.msra.mxu0 %v227
    %335 = vmatprep.subr.bf16.mxu0 0
    %336 = vmatpush1.bf16.msra.mxu0 %v226
    %337 = vmatprep.subr.bf16.mxu0 0
    %338 = vmatpush2.bf16.msra.mxu0 %v241
    %339 = vmatprep.subr.bf16.mxu0 0
    %340 = vmatpush2.bf16.msra.mxu0 %v240
    %341 = vmatprep.subr.bf16.mxu0 0
    %342 = vmatpush2.bf16.msra.mxu0 %v239
    %343 = vmatprep.subr.bf16.mxu0 0
    %344 = vmatpush2.bf16.msra.mxu0 %v238
    %345 = vmatprep.subr.bf16.mxu0 0
    %346 = vmatpush2.bf16.msra.mxu0 %v237
    %347 = vmatprep.subr.bf16.mxu0 0
    %348 = vmatpush2.bf16.msra.mxu0 %v236
    %349 = vmatprep.subr.bf16.mxu0 0
    %350 = vmatpush2.bf16.msra.mxu0 %v235
    %351 = vmatprep.subr.bf16.mxu0 0
    %352 = vmatpush2.bf16.msra.mxu0 %v234
    %353 = vmatprep.mubr.bf16.mxu0 %v77
    %354 = vmatmul.mubr.bf16.gmra.mxu0 %v76
    %v355 = vpop.f32.mrf.mxu0
    %v356 = vadd.f32 %v316, %v355
    %v357 = vpop.f32.mrf.mxu0
    %v358 = vpop.f32.mrf.mxu0
    %v359 = vpop.f32.mrf.mxu0
    %360 = vdwg.mxu0
    %361 = vmatprep.subr.bf16.mxu0 0
    %362 = vmatpush1.bf16.msra.mxu0 %v249
    %363 = vmatprep.subr.bf16.mxu0 0
    %364 = vmatpush1.bf16.msra.mxu0 %v248
    %365 = vmatprep.subr.bf16.mxu0 0
    %366 = vmatpush1.bf16.msra.mxu0 %v247
    %367 = vmatprep.subr.bf16.mxu0 0
    %368 = vmatpush1.bf16.msra.mxu0 %v246
    %369 = vmatprep.subr.bf16.mxu0 0
    %370 = vmatpush1.bf16.msra.mxu0 %v245
    %371 = vmatprep.subr.bf16.mxu0 0
    %372 = vmatpush1.bf16.msra.mxu0 %v244
    %373 = vmatprep.subr.bf16.mxu0 0
    %374 = vmatpush1.bf16.msra.mxu0 %v243
    %375 = vmatprep.subr.bf16.mxu0 0
    %376 = vmatpush1.bf16.msra.mxu0 %v242
    %377 = vmatprep.subr.bf16.mxu0 0
    %378 = vmatpush2.bf16.msra.mxu0 %v257
    %379 = vmatprep.subr.bf16.mxu0 0
    %380 = vmatpush2.bf16.msra.mxu0 %v256
    %381 = vmatprep.subr.bf16.mxu0 0
    %382 = vmatpush2.bf16.msra.mxu0 %v255
    %383 = vmatprep.subr.bf16.mxu0 0
    %384 = vmatpush2.bf16.msra.mxu0 %v254
    %385 = vmatprep.subr.bf16.mxu0 0
    %386 = vmatpush2.bf16.msra.mxu0 %v253
    %387 = vmatprep.subr.bf16.mxu0 0
    %388 = vmatpush2.bf16.msra.mxu0 %v252
    %389 = vmatprep.subr.bf16.mxu0 0
    %390 = vmatpush2.bf16.msra.mxu0 %v251
    %391 = vmatprep.subr.bf16.mxu0 0
    %392 = vmatpush2.bf16.msra.mxu0 %v250
    %393 = vmatprep.mubr.bf16.mxu0 %v79
    %394 = vmatmul.mubr.bf16.gmra.mxu0 %v78
    %v395 = vpop.f32.mrf.mxu0
    %v396 = vadd.f32 %v356, %v395
    %v397 = vpop.f32.mrf.mxu0
    %v398 = vpop.f32.mrf.mxu0
    %v399 = vpop.f32.mrf.mxu0
    %400 = vdwg.mxu0
    %401 = vmatprep.subr.bf16.mxu0 0
    %402 = vmatpush1.bf16.msra.mxu0 %v265
    %403 = vmatprep.subr.bf16.mxu0 0
    %404 = vmatpush1.bf16.msra.mxu0 %v264
    %405 = vmatprep.subr.bf16.mxu0 0
    %406 = vmatpush1.bf16.msra.mxu0 %v263
    %407 = vmatprep.subr.bf16.mxu0 0
    %408 = vmatpush1.bf16.msra.mxu0 %v262
    %409 = vmatprep.subr.bf16.mxu0 0
    %410 = vmatpush1.bf16.msra.mxu0 %v261
    %411 = vmatprep.subr.bf16.mxu0 0
    %412 = vmatpush1.bf16.msra.mxu0 %v260
    %413 = vmatprep.subr.bf16.mxu0 0
    %414 = vmatpush1.bf16.msra.mxu0 %v259
    %415 = vmatprep.subr.bf16.mxu0 0
    %416 = vmatpush1.bf16.msra.mxu0 %v258
    %417 = vmatprep.subr.bf16.mxu0 0
    %418 = vmatpush2.bf16.msra.mxu0 %v273
    %419 = vmatprep.subr.bf16.mxu0 0
    %420 = vmatpush2.bf16.msra.mxu0 %v272
    %421 = vmatprep.subr.bf16.mxu0 0
    %422 = vmatpush2.bf16.msra.mxu0 %v271
    %423 = vmatprep.subr.bf16.mxu0 0
    %424 = vmatpush2.bf16.msra.mxu0 %v270
    %425 = vmatprep.subr.bf16.mxu0 0
    %426 = vmatpush2.bf16.msra.mxu0 %v269
    %427 = vmatprep.subr.bf16.mxu0 0
    %428 = vmatpush2.bf16.msra.mxu0 %v268
    %429 = vmatprep.subr.bf16.mxu0 0
    %430 = vmatpush2.bf16.msra.mxu0 %v267
    %431 = vmatprep.subr.bf16.mxu0 0
    %432 = vmatpush2.bf16.msra.mxu0 %v266
    %433 = vmatprep.mubr.bf16.mxu0 %v81
    %434 = vmatmul.mubr.bf16.gmra.mxu0 %v80
    %v435 = vpop.f32.mrf.mxu0
    %v436 = vadd.f32 %v396, %v435
    %v437 = vpop.f32.mrf.mxu0
    %v438 = vpop.f32.mrf.mxu0
    %v439 = vpop.f32.mrf.mxu0
    %440 = vdwg.mxu0
    %v441 = vmax.f32 %v436, 0.0
    %v442 = vpack.c.bf16 %v441, %v441
    %v443 = vld [vmem:[%s3] sm:$0xff]
    %v444 = vld [vmem:[%s3 + $0x8] sm:$0xff]
    %v445 = vld [vmem:[%s3 + $0x10] sm:$0xff]
    %v446 = vld [vmem:[%s3 + $0x18] sm:$0xff]
    %v447 = vld [vmem:[%s3 + $0x20] sm:$0xff]
    %v448 = vld [vmem:[%s3 + $0x28] sm:$0xff]
    %v449 = vld [vmem:[%s3 + $0x30] sm:$0xff]
    %v450 = vld [vmem:[%s3 + $0x38] sm:$0xff]
    %v451 = vpack.c.bf16 %v444, %v443
    %v452 = vpack.c.bf16 %v446, %v445
    %v453 = vpack.c.bf16 %v448, %v447
    %v454 = vpack.c.bf16 %v450, %v449
    %v455 = vld [vmem:[%s4] sm:$0x1]
    %v457 = vlaneseq
    %v458 = vshrl.u32 %v457, 7
    %v459 = vsub.s32 0, %v458
    %v460 = vrot.slane %v455, %v459
    %vm462 = vcmask 523264
    %v464 = vsel %vm462, %v442, 0
    %466 = vmatprep.subr.bf16.mxu0 0
    %467 = vmatpush1.bf16.msra.mxu0 0
    %468 = vmatprep.subr.bf16.mxu0 0
    %469 = vmatpush1.bf16.msra.mxu0 0
    %470 = vmatprep.subr.bf16.mxu0 0
    %471 = vmatpush1.bf16.msra.mxu0 0
    %472 = vmatprep.subr.bf16.mxu0 0
    %473 = vmatpush1.bf16.msra.mxu0 0
    %474 = vmatprep.subr.bf16.mxu0 0
    %475 = vmatpush1.bf16.msra.mxu0 %v454
    %476 = vmatprep.subr.bf16.mxu0 0
    %477 = vmatpush1.bf16.msra.mxu0 %v453
    %478 = vmatprep.subr.bf16.mxu0 0
    %479 = vmatpush1.bf16.msra.mxu0 %v452
    %480 = vmatprep.subr.bf16.mxu0 0
    %481 = vmatpush1.bf16.msra.mxu0 %v451
    %482 = vmatprep.subr.bf16.mxu0 0
    %483 = vmatpush2.bf16.msra.mxu0 0
    %484 = vmatprep.subr.bf16.mxu0 0
    %485 = vmatpush2.bf16.msra.mxu0 0
    %486 = vmatprep.subr.bf16.mxu0 0
    %487 = vmatpush2.bf16.msra.mxu0 0
    %488 = vmatprep.subr.bf16.mxu0 0
    %489 = vmatpush2.bf16.msra.mxu0 0
    %490 = vmatprep.subr.bf16.mxu0 0
    %491 = vmatpush2.bf16.msra.mxu0 0
    %492 = vmatprep.subr.bf16.mxu0 0
    %493 = vmatpush2.bf16.msra.mxu0 0
    %494 = vmatprep.subr.bf16.mxu0 0
    %495 = vmatpush2.bf16.msra.mxu0 0
    %496 = vmatprep.subr.bf16.mxu0 0
    %497 = vmatpush2.bf16.msra.mxu0 0
    %498 = vmatprep.mubr.bf16.mxu0 0
    %499 = vmatmul.mubr.bf16.gmra.mxu0 %v464
    %v500 = vpop.f32.mrf.mxu0
    %v501 = vadd.f32 %v460, %v500
    %v502 = vpop.f32.mrf.mxu0
    %v503 = vpop.f32.mrf.mxu0
    %v504 = vpop.f32.mrf.mxu0
    %505 = vdwg.mxu0
    %v506 = vmax.f32 %v501, 0.0
    %v507 = vpack.c.bf16 %v506, %v506
    %v508 = vld [vmem:[%s5] sm:$0xff]
    %v509 = vld [vmem:[%s5 + $0x8] sm:$0xff]
    %v510 = vld [vmem:[%s5 + $0x10] sm:$0xff]
    %v511 = vld [vmem:[%s5 + $0x18] sm:$0xff]
    %v512 = vld [vmem:[%s5 + $0x20] sm:$0xff]
    %v513 = vld [vmem:[%s5 + $0x28] sm:$0xff]
    %v514 = vld [vmem:[%s5 + $0x30] sm:$0xff]
    %v515 = vld [vmem:[%s5 + $0x38] sm:$0xff]
    %v516 = vpack.c.bf16 %v509, %v508
    %v517 = vpack.c.bf16 %v511, %v510
    %v518 = vpack.c.bf16 %v513, %v512
    %v519 = vpack.c.bf16 %v515, %v514
    %v520 = vld [vmem:[%s6] sm:$0x1]
    %v522 = vlaneseq
    %v523 = vshrl.u32 %v522, 7
    %v524 = vsub.s32 0, %v523
    %v525 = vrot.slane %v520, %v524
    %v528 = vsel %vm462, %v507, 0
    %530 = vmatprep.subr.bf16.mxu0 0
    %531 = vmatpush1.bf16.msra.mxu0 0
    %532 = vmatprep.subr.bf16.mxu0 0
    %533 = vmatpush1.bf16.msra.mxu0 0
    %534 = vmatprep.subr.bf16.mxu0 0
    %535 = vmatpush1.bf16.msra.mxu0 0
    %536 = vmatprep.subr.bf16.mxu0 0
    %537 = vmatpush1.bf16.msra.mxu0 0
    %538 = vmatprep.subr.bf16.mxu0 0
    %539 = vmatpush1.bf16.msra.mxu0 %v519
    %540 = vmatprep.subr.bf16.mxu0 0
    %541 = vmatpush1.bf16.msra.mxu0 %v518
    %542 = vmatprep.subr.bf16.mxu0 0
    %543 = vmatpush1.bf16.msra.mxu0 %v517
    %544 = vmatprep.subr.bf16.mxu0 0
    %545 = vmatpush1.bf16.msra.mxu0 %v516
    %546 = vmatprep.subr.bf16.mxu0 0
    %547 = vmatpush2.bf16.msra.mxu0 0
    %548 = vmatprep.subr.bf16.mxu0 0
    %549 = vmatpush2.bf16.msra.mxu0 0
    %550 = vmatprep.subr.bf16.mxu0 0
    %551 = vmatpush2.bf16.msra.mxu0 0
    %552 = vmatprep.subr.bf16.mxu0 0
    %553 = vmatpush2.bf16.msra.mxu0 0
    %554 = vmatprep.subr.bf16.mxu0 0
    %555 = vmatpush2.bf16.msra.mxu0 0
    %556 = vmatprep.subr.bf16.mxu0 0
    %557 = vmatpush2.bf16.msra.mxu0 0
    %558 = vmatprep.subr.bf16.mxu0 0
    %559 = vmatpush2.bf16.msra.mxu0 0
    %560 = vmatprep.subr.bf16.mxu0 0
    %561 = vmatpush2.bf16.msra.mxu0 0
    %562 = vmatprep.mubr.bf16.mxu0 0
    %563 = vmatmul.mubr.bf16.gmra.mxu0 %v528
    %v564 = vpop.f32.mrf.mxu0
    %v565 = vadd.f32 %v525, %v564
    %v566 = vpop.f32.mrf.mxu0
    %v567 = vpop.f32.mrf.mxu0
    %v568 = vpop.f32.mrf.mxu0
    %569 = vdwg.mxu0
    %vm570 = vcmask 58368
    %571 = vst.msk [vmem:[#allocation2] sm:$0x3] %vm570, %v565
    // Predicated region
    $region30: #{tpu_custom_call.1} parent=1 // pred_check
      _
    $region31: #{tpu_custom_call.1} parent=1 // pred_check_branch
      %573 = sbr.rel (0) target = $region33
    $region32: #{tpu_custom_call.1} parent=1 // pred_region
      %s575 = ssub.s32 32, 32
      %576 = vsyncadd [#allocation3], %s575
      %s578 = sshll.u32 [#allocation2], 4
      %s579 = int_to_ptr.vmem [resolvable:$true] %s578
      %581 = dma.vmem_to_hbm [thread:$0]  %s579, 32, %s7, [#allocation3]
    $region33: #{tpu_custom_call.1} parent=1 // pred_fallthru
      _
    // Predicated region
    $region34: #{tpu_custom_call.1} parent=1 // pred_check
      _
    $region35: #{tpu_custom_call.1} parent=1 // pred_check_branch
      %583 = sbr.rel (0) target = $region37
    $region36: #{tpu_custom_call.1} parent=1 // pred_region
      %584 = dma.done [#allocation3], 32
    $region37: #{tpu_custom_call.1} parent=1 // pred_fallthru
      _
    %585 = vsyncpa [#allocation3], 1

</llo_original>
